<compile_context>
chip_gen: v7x
topology: tpu7x:2x2x1
jax: 0.10.0
libtpu: 0.0.40
codegen_flags: <defaults>
</compile_context>

<pallas_src>
import jax
import jax.numpy as jnp
from jax.experimental import pallas as pl
from jax.experimental.pallas import tpu as pltpu


def _qa_head_kernel(x_ref, w_ref, b_ref, o_ref):
    # x_ref: (TM, H)  activation tile (streamed, double-buffered)
    # w_ref: (H,  L)  weight, pre-transposed once in the wrapper (resident)
    # b_ref: (1,  L)  bias (resident)
    # o_ref: (TM, L)  logits tile
    acc = jnp.dot(x_ref[...], w_ref[...], preferred_element_type=jnp.float32)
    o_ref[...] = (acc + b_ref[...].astype(jnp.float32)).astype(o_ref.dtype)


def _round_up(x, m):
    return ((x + m - 1) // m) * m


def qa_head_forward(hidden_states, weight, bias):
    """hidden_states: (B, S, H); weight: (L, H) [PyTorch layout]; bias: (L,)."""
    B, S, H = hidden_states.shape
    L = weight.shape[0]
    M = B * S

    x = hidden_states.reshape(M, H)
    w_t = weight.T            # one-time tiny (H, L) transpose, outside the grid
    b2 = bias.reshape(1, L)

    x_item = jnp.dtype(hidden_states.dtype).itemsize
    w_item = jnp.dtype(weight.dtype).itemsize
    out_item = x_item

    # ---- generation-aware token-tile size TM ----------------------------
    # Budget ~3/8 of physical VMEM for the double-buffered activation tile:
    # ~24 MiB on 64-MiB-VMEM chips (v7x), ~48 MiB on 128-MiB chips (v5e/v6e).
    try:
        vmem_cap = int(pltpu.get_tpu_info().vmem_capacity_bytes)
    except Exception:
        vmem_cap = 64 * 1024 * 1024  # conservative (v7x) fallback
    act_budget = max(8 << 20, (vmem_cap * 3) // 8)

    TM_TARGET = 2048  # amortize ~0.35 us per-grid-step overhead
    max_tm_by_vmem = max(8, (act_budget // (2 * H * x_item)) // 8 * 8)
    TM = min(TM_TARGET, max_tm_by_vmem)
    TM = min(TM, _round_up(M, 8))          # don't exceed the token count
    TM = max(8, (TM // 8) * 8)             # multiple of 8 sublanes

    # Ragged last block handled by Pallas masking — no wrapper-side padding.
    grid = (pl.cdiv(M, TM),)

    # Explicit scoped-VMEM limit: double-buffered x + out tiles, resident
    # weight/bias, plus headroom; never above physical VMEM.
    vmem_needed = (2 * TM * H * x_item          # x, double-buffered
                   + 2 * TM * L * out_item      # out, double-buffered
                   + H * L * w_item             # resident weight
                   + L * w_item                 # bias
                   + (2 << 20))                 # headroom
    vmem_ceiling = min(100 * 1024 * 1024, vmem_cap - (4 << 20))
    vmem_limit = int(min(max(vmem_needed, 32 * 1024 * 1024), vmem_ceiling))

    cost = pl.CostEstimate(
        flops=2 * M * H * L,
        transcendentals=0,
        bytes_accessed=(M * H * x_item      # read activations
                        + H * L * w_item    # read weight
                        + L * w_item        # read bias
                        + M * L * out_item  # write logits
                        ),
    )

    out = pl.pallas_call(
        _qa_head_kernel,
        out_shape=jax.ShapeDtypeStruct((M, L), hidden_states.dtype),
        grid_spec=pltpu.PrefetchScalarGridSpec(
            num_scalar_prefetch=0,
            grid=grid,
            in_specs=[
                pl.BlockSpec((TM, H), lambda i: (i, 0)),   # stream activations
                pl.BlockSpec((H, L), lambda i: (0, 0)),    # weight stays resident
                pl.BlockSpec((1, L), lambda i: (0, 0)),    # bias stays resident
            ],
            out_specs=pl.BlockSpec((TM, L), lambda i: (i, 0)),
        ),
        compiler_params=pltpu.CompilerParams(
            dimension_semantics=("parallel",),   # shard tokens across TCs (v7x)
            vmem_limit_bytes=vmem_limit,
        ),
        cost_estimate=cost,
    )(x, w_t, b2)

    return out.reshape(B, S, L)


if __name__ == "__main__":
    # Small shapes consistent with the module: hidden_size, num_labels
    batch, seq, hidden_size, num_labels = 2, 8, 32, 2

    key = jax.random.PRNGKey(0)
    k_x, k_w, k_b = jax.random.split(key, 3)

    hidden_states = jax.random.normal(
        k_x, (batch, seq, hidden_size), dtype=jnp.float32)

    # Deterministic parameter init (PyTorch Linear: uniform(-1/sqrt(H), 1/sqrt(H)))
    bound = 1.0 / (hidden_size ** 0.5)
    weight = jax.random.uniform(k_w, (num_labels, hidden_size),
                                minval=-bound, maxval=bound, dtype=jnp.float32)
    bias = jax.random.uniform(k_b, (num_labels,),
                              minval=-bound, maxval=bound, dtype=jnp.float32)

    out = qa_head_forward(hidden_states, weight, bias)
    out = jax.block_until_ready(out)

    # Reference check against plain JAX (same math as PyTorch Linear)
    ref = hidden_states @ weight.T + bias
    assert out.shape == (batch, seq, num_labels)
    assert jnp.allclose(out, ref, atol=1e-5, rtol=1e-5)

    print("KERNEL_OK")
</pallas_src>

<mosaic_0001>
module attributes {stable_mosaic.version = 11 : i64} {
  func.func @_qa_head_kernel(%arg0: i32, %arg1: memref<16x32xf32, #tpu.memory_space<vmem>>, %arg2: memref<32x2xf32, #tpu.memory_space<vmem>>, %arg3: memref<1x2xf32, #tpu.memory_space<vmem>>, %arg4: memref<16x2xf32, #tpu.memory_space<vmem>>) attributes {dimension_semantics = [#tpu.dimension_semantics<parallel>], iteration_bounds = array<i64: 1>, scalar_prefetch = 0 : i64, scratch_operands = 0 : i64, tpu.core_type = #tpu.core_type<tc>, window_params = [{transform_indices = @transform_0, window_bounds = array<i64: 16, 32>}, {pipeline_mode = #tpu.pipeline_mode<synchronous>, transform_indices = @transform_1, window_bounds = array<i64: 32, 2>}, {pipeline_mode = #tpu.pipeline_mode<synchronous>, transform_indices = @transform_2, window_bounds = array<i64: 1, 2>}, {transform_indices = @transform_3, window_bounds = array<i64: 16, 2>}]} {
    %c0 = arith.constant 0 : index
    %c0_0 = arith.constant 0 : index
    %0 = vector.load %arg1[%c0, %c0_0] : memref<16x32xf32, #tpu.memory_space<vmem>>, vector<16x32xf32>
    %c0_1 = arith.constant 0 : index
    %c0_2 = arith.constant 0 : index
    %1 = vector.load %arg2[%c0_1, %c0_2] : memref<32x2xf32, #tpu.memory_space<vmem>>, vector<32x2xf32>
    %cst = arith.constant dense<0.000000e+00> : vector<16x2xf32>
    %2 = tpu.matmul %0, %1, %cst {dimension_numbers = #tpu.dot_dimension_numbers<[1], [0], [0], [1], [0, 0, 1, 1], [], []>} : vector<16x32xf32>, vector<32x2xf32>, vector<16x2xf32> -> vector<16x2xf32>
    %c0_3 = arith.constant 0 : index
    %c0_4 = arith.constant 0 : index
    %3 = vector.load %arg3[%c0_3, %c0_4] : memref<1x2xf32, #tpu.memory_space<vmem>>, vector<1x2xf32>
    %4 = vector.broadcast %3 : vector<1x2xf32> to vector<16x2xf32>
    %5 = arith.addf %2, %4 : vector<16x2xf32>
    %c0_5 = arith.constant 0 : index
    %c0_6 = arith.constant 0 : index
    %6 = vector.load %arg4[%c0_5, %c0_6] : memref<16x2xf32, #tpu.memory_space<vmem>>, vector<16x2xf32>
    tpu.vector_store %arg4[%c0_5, %c0_6], %5 {strides = array<i32>} : memref<16x2xf32, #tpu.memory_space<vmem>>, vector<16x2xf32>,
    return
  }
  func.func @transform_0(%arg0: i32) -> (i32, i32) {
    %c0_i32 = arith.constant 0 : i32
    %c0_i32_0 = arith.constant 0 : i32
    return %arg0, %c0_i32 : i32, i32
  }
  func.func @transform_1(%arg0: i32) -> (i32, i32) {
    %c0_i32 = arith.constant 0 : i32
    %c0_i32_0 = arith.constant 0 : i32
    %c0_i32_1 = arith.constant 0 : i32
    return %c0_i32, %c0_i32_0 : i32, i32
  }
  func.func @transform_2(%arg0: i32) -> (i32, i32) {
    %c0_i32 = arith.constant 0 : i32
    %c0_i32_0 = arith.constant 0 : i32
    %c0_i32_1 = arith.constant 0 : i32
    return %c0_i32, %c0_i32_0 : i32, i32
  }
  func.func @transform_3(%arg0: i32) -> (i32, i32) {
    %c0_i32 = arith.constant 0 : i32
    %c0_i32_0 = arith.constant 0 : i32
    return %arg0, %c0_i32 : i32, i32
  }
}

</mosaic_0001>

<llo_original>
// kernel: tpu_custom_call.1
$region0: #{tpu_custom_call.1}
  #allocation0 [shape = 'u32[]', space=smem, size = 0x4, offset = 0x4, fixed_abs, tag = 'smem constant byte address 0x4 - core index']
  #allocation1 [shape = 'u32[144,128]{1,0:T(1,128)}', space=vmem, size = 0x12000, scoped, tag = 'internal scratch']
  %s0 = inlined_call_operand.vmem [shape: f32[16,32], index: 0, kind: input, shape index: {}]
  %s1 = inlined_call_operand.vmem [shape: f32[32,2], index: 1, kind: input, shape index: {}]
  %s2 = inlined_call_operand.vmem [shape: f32[1,2], index: 2, kind: input, shape index: {}]
  %s3 = inlined_call_operand.vmem [shape: f32[16,2], index: 3, kind: output, shape index: {}]
  %s4 = sld [smem:[#allocation0]]
  $region22: #{tpu_custom_call.1} parent=0
    _
  %s6 = ssub.s32 1, %s4
  %s7 = scalar_select 0, %s6, %s4
  // Predicated region
  $region2: #{tpu_custom_call.1} parent=0 // pred_check
    _
  $region3: #{tpu_custom_call.1} parent=0 // pred_check_branch
    %9 = sbr.rel (0) target = $region5
  $region4: #{tpu_custom_call.1} parent=0 // pred_region
    _
  $region5: #{tpu_custom_call.1} parent=0 // pred_fallthru
    _
  // Predicated region
  $region6: #{tpu_custom_call.1} parent=0 // pred_check
    _
  $region7: #{tpu_custom_call.1} parent=0 // pred_check_branch
    %11 = sbr.rel (0) target = $region9
  $region8: #{tpu_custom_call.1} parent=0 // pred_region
    _
  $region9: #{tpu_custom_call.1} parent=0 // pred_fallthru
    _
  // Predicated region
  $region10: #{tpu_custom_call.1} parent=0 // pred_check
    _
  $region11: #{tpu_custom_call.1} parent=0 // pred_check_branch
    %13 = sbr.rel (0) target = $region13
  $region12: #{tpu_custom_call.1} parent=0 // pred_region
    _
  $region13: #{tpu_custom_call.1} parent=0 // pred_fallthru
    _
  %v14 = vld [vmem:[%s0] sm:$0xff]
  %v15 = vld [vmem:[%s0 + $0x8] sm:$0xff]
  %v16 = vld [vmem:[%s1] sm:$0xff]
  %v17 = vld [vmem:[%s1 + $0x8] sm:$0xff]
  %v18 = vld [vmem:[%s1 + $0x10] sm:$0xff]
  %v19 = vld [vmem:[%s1 + $0x18] sm:$0xff]
  %v20 = vld [vmem:[%s2] sm:$0x1]
  %v22 = vlaneseq
  %v23 = vshrl.u32 %v22, 7
  %v24 = vsub.s32 0, %v23
  %v25 = vrot.slane %v20, %v24
  %vm27 = vcmask 261120
  %v29 = vsel %vm27, %v14, 0
  %v32 = vsel %vm27, %v15, 0
  %34 = vmatprep.subr.mxu0 0.0
  %35 = vmatpush1.msra.mxu0 %v16
  %36 = vmatprep.subr.mxu0 0.0
  %37 = vmatpush1.msra.mxu0 %v17
  %38 = vmatprep.subr.mxu0 0.0
  %39 = vmatpush1.msra.mxu0 %v18
  %40 = vmatprep.subr.mxu0 0.0
  %41 = vmatpush1.msra.mxu0 %v19
  %42 = vmatprep.subr.mxu0 0.0
  %43 = vmatpush1.msra.mxu0 0.0
  %44 = vmatprep.subr.mxu0 0.0
  %45 = vmatpush1.msra.mxu0 0.0
  %46 = vmatprep.subr.mxu0 0.0
  %47 = vmatpush1.msra.mxu0 0.0
  %48 = vmatprep.subr.mxu0 0.0
  %49 = vmatpush1.msra.mxu0 0.0
  %50 = vmatprep.subr.mxu0 0.0
  %51 = vmatpush1.msra.mxu0 0.0
  %52 = vmatprep.subr.mxu0 0.0
  %53 = vmatpush1.msra.mxu0 0.0
  %54 = vmatprep.subr.mxu0 0.0
  %55 = vmatpush1.msra.mxu0 0.0
  %56 = vmatprep.subr.mxu0 0.0
  %57 = vmatpush1.msra.mxu0 0.0
  %58 = vmatprep.subr.mxu0 0.0
  %59 = vmatpush1.msra.mxu0 0.0
  %60 = vmatprep.subr.mxu0 0.0
  %61 = vmatpush1.msra.mxu0 0.0
  %62 = vmatprep.subr.mxu0 0.0
  %63 = vmatpush1.msra.mxu0 0.0
  %64 = vmatprep.subr.mxu0 0.0
  %65 = vmatpush1.msra.mxu0 0.0
  %66 = vmatprep.subr.mxu0 0.0
  %67 = vmatpush1.msra.mxu0 0.0
  %68 = vmatprep.subr.mxu0 0.0
  %69 = vmatpush1.msra.mxu0 0.0
  %70 = vmatprep.subr.mxu0 0.0
  %71 = vmatpush1.msra.mxu0 0.0
  %72 = vmatprep.subr.mxu0 0.0
  %73 = vmatpush1.msra.mxu0 0.0
  %74 = vmatprep.subr.mxu0 0.0
  %75 = vmatpush1.msra.mxu0 0.0
  %76 = vmatprep.subr.mxu0 0.0
  %77 = vmatpush1.msra.mxu0 0.0
  %78 = vmatprep.subr.mxu0 0.0
  %79 = vmatpush1.msra.mxu0 0.0
  %80 = vmatprep.subr.mxu0 0.0
  %81 = vmatpush1.msra.mxu0 0.0
  %82 = vmatprep.subr.mxu0 0.0
  %83 = vmatpush1.msra.mxu0 0.0
  %84 = vmatprep.subr.mxu0 0.0
  %85 = vmatpush1.msra.mxu0 0.0
  %86 = vmatprep.subr.mxu0 0.0
  %87 = vmatpush1.msra.mxu0 0.0
  %88 = vmatprep.subr.mxu0 0.0
  %89 = vmatpush1.msra.mxu0 0.0
  %90 = vmatprep.subr.mxu0 0.0
  %91 = vmatpush1.msra.mxu0 0.0
  %92 = vmatprep.subr.mxu0 0.0
  %93 = vmatpush1.msra.mxu0 0.0
  %94 = vmatprep.subr.mxu0 0.0
  %95 = vmatpush1.msra.mxu0 0.0
  %96 = vmatprep.subr.mxu0 0.0
  %97 = vmatpush1.msra.mxu0 0.0
  %98 = vmatprep.mubr.f32.mxu0 0.0
  %99 = vmatmul.mubr.f32.gmra.mrb[0].mxu0 %v29
  %v100 = vpop.f32.mrb[0].mxu0
  %v101 = vadd.f32 %v25, %v100
  %v102 = vpop.f32.mrb[0].mxu0
  %103 = vmatprep.mubr.f32.mxu0 0.0
  %104 = vmatmul.mubr.f32.gmra.mrb[0].mxu0 %v32
  %v105 = vpop.f32.mrb[0].mxu0
  %v106 = vadd.f32 %v25, %v105
  %v107 = vpop.f32.mrb[0].mxu0
  %108 = vdwg.mxu0
  %vm109 = vcmask 15360
  %110 = vst.msk [vmem:[%s3] sm:$0xff] %vm109, %v101
  %111 = vst.msk [vmem:[%s3 + $0x8] sm:$0xff] %vm109, %v106
  // Predicated region
  $region14: #{tpu_custom_call.1} parent=0 // pred_check
    _
  $region15: #{tpu_custom_call.1} parent=0 // pred_check_branch
    %113 = sbr.rel (0) target = $region17
  $region16: #{tpu_custom_call.1} parent=0 // pred_region
    _
  $region17: #{tpu_custom_call.1} parent=0 // pred_fallthru
    _
  // Predicated region
  $region18: #{tpu_custom_call.1} parent=0 // pred_check
    _
  $region19: #{tpu_custom_call.1} parent=0 // pred_check_branch
    %115 = sbr.rel (0) target = $region21
  $region20: #{tpu_custom_call.1} parent=0 // pred_region
    _
  $region21: #{tpu_custom_call.1} parent=0 // pred_fallthru
    _

</llo_original>
